<compile_context>
chip_gen: v7x
topology: tpu7x:2x2x1
jax: 0.10.0
libtpu: 0.0.40
codegen_flags: <defaults>
</compile_context>

<pallas_src>
import functools
from typing import NamedTuple, Tuple

import jax
import jax.numpy as jnp
from jax.experimental import pallas as pl
from jax.experimental.pallas import tpu as pltpu


def _round_up(n: int, m: int) -> int:
    return ((n + m - 1) // m) * m


def _cdiv(a: int, b: int) -> int:
    return (a + b - 1) // b


# ---------------------------------------------------------------------------
# Cached capability / hardware queries.
# ---------------------------------------------------------------------------

_BUFFERED1_OK = None


def _single_buffer_supported() -> bool:
    """Probe whether pipeline_mode=pl.Buffered(1) works for grid-invariant
    inputs on this JAX/TPU; fall back to default double-buffering otherwise."""
    global _BUFFERED1_OK
    if _BUFFERED1_OK is not None:
        return _BUFFERED1_OK
    ok = False
    if hasattr(pl, "Buffered"):
        def _probe(x_ref, o_ref):
            o_ref[...] = x_ref[...] + 1.0
        try:
            fn = pl.pallas_call(
                _probe,
                out_shape=jax.ShapeDtypeStruct((16, 128), jnp.float32),
                grid=(2,),
                in_specs=[pl.BlockSpec((8, 128), lambda i: (0, 0),
                                       pipeline_mode=pl.Buffered(1))],
                out_specs=pl.BlockSpec((8, 128), lambda i: (i, 0)),
            )
            res = jax.block_until_ready(fn(jnp.zeros((8, 128), jnp.float32)))
            ok = bool(jnp.all(res == 1.0))
        except Exception:
            ok = False
    _BUFFERED1_OK = ok
    return ok


def _vmem_capacity_bytes() -> int:
    """Per-core VMEM capacity; conservative 64 MiB fallback (safe on v7x too)."""
    try:
        info = pltpu.get_tpu_info()
        cap = getattr(info, "vmem_capacity_bytes", None)
        if cap:
            return int(cap)
    except Exception:
        pass
    return 64 * 1024 * 1024


# ---------------------------------------------------------------------------
# Parameter preparation (done ONCE, outside the per-call forward).
# ---------------------------------------------------------------------------

class HierarchyBlockParams(NamedTuple):
    operands: Tuple[jax.Array, ...]   # (w0, b0, w1, b1, ...), padded
    dims_pad: Tuple[int, ...]         # padded feature dims, len = n_layers + 1
    in_dim: int
    num_classes: int
    n_hidden: int                     # number of hidden (ReLU'd) layers
    use_bf16: bool


def prepare_params(weights, biases, *, use_bf16=False) -> HierarchyBlockParams:
    """Zero-pad every feature dim to a multiple of 128 (lane-dense) and
    optionally cast weights to bf16. Biases stay f32 (bias-add/ReLU run in f32
    on the VPU; v5e has no bf16 VPU)."""
    in_dim = int(weights[0].shape[0])
    num_classes = int(weights[-1].shape[1])
    dims = [in_dim] + [int(w.shape[1]) for w in weights]
    dims_pad = tuple(_round_up(d, 128) for d in dims)
    w_dtype = jnp.bfloat16 if use_bf16 else jnp.float32

    ops = []
    for i, (w, b) in enumerate(zip(weights, biases)):
        in_p, out_p = dims_pad[i], dims_pad[i + 1]
        w_p = jnp.pad(w, ((0, in_p - w.shape[0]), (0, out_p - w.shape[1])))
        ops.append(w_p.astype(w_dtype))
        b2 = jnp.asarray(b).reshape(1, -1)
        ops.append(jnp.pad(b2, ((0, 0), (0, out_p - b2.shape[1])))
                   .astype(jnp.float32))
    return HierarchyBlockParams(tuple(ops), dims_pad, in_dim, num_classes,
                                len(weights) - 1, use_bf16)


# ---------------------------------------------------------------------------
# Kernel.
# ---------------------------------------------------------------------------

def _mlp_kernel(n_hidden_layers, compute_dtype, *refs):
    """Fused MLP kernel for one batch tile.

    refs = (x_ref, w0, b0, w1, b1, ..., w_last, b_last, out_ref)
    Hidden layers (the first n_hidden_layers) get ReLU; the final linear does
    not. Dropout is identity (eval mode).
    """
    x_ref = refs[0]
    out_ref = refs[-1]
    param_refs = refs[1:-1]
    n_layers = len(param_refs) // 2  # = n_hidden_layers + 1

    # x is already in compute_dtype (cast + padded in the wrapper).
    h = x_ref[...]
    for layer in range(n_layers):
        w_ref = param_refs[2 * layer]
        b_ref = param_refs[2 * layer + 1]
        # MXU matmul: inputs in compute_dtype (f32 or bf16), accumulate in f32.
        h = jnp.dot(h.astype(compute_dtype), w_ref[...],
                    preferred_element_type=jnp.float32)
        # Bias add + ReLU stay in f32.
        h = h + b_ref[...]
        if layer < n_hidden_layers:
            h = jnp.maximum(h, 0.0)  # ReLU; Dropout(eval) == identity
    out_ref[...] = h.astype(out_ref.dtype)


# ---------------------------------------------------------------------------
# Forward wrapper.
# ---------------------------------------------------------------------------

def hierarchy_block_forward(x, params: HierarchyBlockParams, *,
                            block_batch=None, out_dtype=jnp.float32):
    """HierarchyBlock MLP forward via a single batch-tiled Pallas kernel.

    x:      [batch, in_dim] float32 (cast to bf16 for DMA if params.use_bf16)
    params: output of prepare_params (pre-padded, VMEM-resident in the kernel)
    """
    batch, in_dim = x.shape
    assert in_dim == params.in_dim, (in_dim, params.in_dim)
    dims_pad = params.dims_pad
    use_bf16 = params.use_bf16
    compute_dtype = jnp.bfloat16 if use_bf16 else jnp.float32
    out_dtype = jnp.dtype(out_dtype)

    # Sublane granularity for the batch tile (bf16 packs 16 rows per vreg).
    sub = 16 if (use_bf16 or out_dtype.itemsize < 4) else 8

    single_buf = _single_buffer_supported()
    param_bytes = sum(int(o.size) * o.dtype.itemsize for o in params.operands)
    # Default pipelining double-buffers every input: count it.
    param_resident = param_bytes * (1 if single_buf else 2)

    cap = _vmem_capacity_bytes()
    usable = max(32 << 20, cap - (12 << 20))     # leave compiler headroom

    # Size the batch tile from the VMEM left after resident params.
    x_item = jnp.dtype(compute_dtype).itemsize
    act_row = 4 * max(dims_pad) * 4              # f32 activation working set
    per_row = (2 * dims_pad[0] * x_item          # double-buffered x tile
               + 2 * dims_pad[-1] * out_dtype.itemsize  # double-buffered out
               + act_row)
    avail = usable - param_resident - (2 << 20)
    if avail < per_row * sub:
        # TODO(synk): add a K-reduction grid axis / emit_pipeline over weight
        # tiles for layers too large for whole-weight VMEM residency.
        raise NotImplementedError(
            "HierarchyBlock layer parameters exceed the VMEM budget; "
            "K/N weight tiling is not implemented.")
    tb_vmem = max(sub, (avail // per_row) // sub * sub)

    target = _round_up(block_batch, sub) if block_batch is not None else 1024
    tb = max(sub, min(target, tb_vmem, _round_up(batch, sub)))
    # Even-split the grid so batch padding waste is < `sub` rows per tile.
    nt = _cdiv(batch, tb)
    tb = _round_up(_cdiv(batch, nt), sub)
    batch_pad = nt * tb
    grid = (nt,)

    # Only per-call operand prep: pad (and cast) x.
    x_p = jnp.pad(x.astype(compute_dtype),
                  ((0, batch_pad - batch), (0, dims_pad[0] - in_dim)))

    # BlockSpecs: x / out move per batch tile; weights & biases use constant
    # index maps (VMEM-resident), single-buffered when supported.
    x_spec = pl.BlockSpec((tb, dims_pad[0]), lambda i: (i, 0))
    out_spec = pl.BlockSpec((tb, dims_pad[-1]), lambda i: (i, 0))
    param_specs = []
    n_layers = params.n_hidden + 1
    for li in range(n_layers):
        in_p, out_p = dims_pad[li], dims_pad[li + 1]
        if single_buf:
            param_specs.append(pl.BlockSpec((in_p, out_p), lambda i: (0, 0),
                                            pipeline_mode=pl.Buffered(1)))
            param_specs.append(pl.BlockSpec((1, out_p), lambda i: (0, 0),
                                            pipeline_mode=pl.Buffered(1)))
        else:
            param_specs.append(pl.BlockSpec((in_p, out_p), lambda i: (0, 0)))
            param_specs.append(pl.BlockSpec((1, out_p), lambda i: (0, 0)))

    kernel = functools.partial(_mlp_kernel, params.n_hidden, compute_dtype)

    out_padded = pl.pallas_call(
        kernel,
        out_shape=jax.ShapeDtypeStruct((batch_pad, dims_pad[-1]), out_dtype),
        grid=grid,
        in_specs=[x_spec] + param_specs,
        out_specs=out_spec,
        compiler_params=pltpu.CompilerParams(
            # Batch tiles are independent -> parallel (megacore on v7x).
            dimension_semantics=("parallel",),
            vmem_limit_bytes=int(usable),
        ),
    )(x_p, *params.operands)

    return out_padded[:batch, :params.num_classes]


# ---------------------------------------------------------------------------
# Parameter init + pure-JAX reference.
# ---------------------------------------------------------------------------

def init_params(arch, num_classes, key):
    """Deterministic parameter init for the MLP described by HierarchyBlock.

    arch = [c0, c1, ..., cL]  ->  Linear(c0,c1), ..., Linear(c_{L-1}, cL),
    then final Linear(cL, num_classes).
    """
    in_list = list(arch[:-1])
    out_list = list(arch[1:])
    layer_dims = list(zip(in_list, out_list)) + [(out_list[-1], num_classes)]

    weights, biases = [], []
    for i, (fan_in, fan_out) in enumerate(layer_dims):
        kw, kb, key = jax.random.split(jax.random.fold_in(key, i), 3)
        bound = 1.0 / jnp.sqrt(jnp.float32(fan_in))
        # Stored as [in, out] (transpose of PyTorch's [out, in]); math identical.
        w = jax.random.uniform(kw, (fan_in, fan_out), jnp.float32, -bound, bound)
        b = jax.random.uniform(kb, (1, fan_out), jnp.float32, -bound, bound)
        weights.append(w)
        biases.append(b)
    return weights, biases


def reference_forward(x, weights, biases):
    h = x
    n_hidden = len(weights) - 1
    for i, (w, b) in enumerate(zip(weights, biases)):
        h = h @ w + b
        if i < n_hidden:
            h = jnp.maximum(h, 0.0)
    return h


if __name__ == "__main__":
    key = jax.random.PRNGKey(0)

    # Small shapes consistent with the module: arch defines the MLP widths.
    arch = [32, 64, 48]
    num_classes = 16
    batch = 16

    kx, kp = jax.random.split(key)
    x = jax.random.normal(kx, (batch, arch[0]), jnp.float32)
    weights, biases = init_params(arch, num_classes, kp)

    ref = reference_forward(x, weights, biases)

    # f32 path, default tile sizing (single tile at this batch).
    params_f32 = prepare_params(weights, biases, use_bf16=False)
    out = hierarchy_block_forward(x, params_f32)
    out = jax.block_until_ready(out)
    assert out.shape == (batch, num_classes), out.shape
    assert jnp.allclose(out, ref, atol=1e-4, rtol=1e-4), (
        float(jnp.max(jnp.abs(out - ref))))

    # f32 path with a tiny block_batch so the grid has >1 batch tile and the
    # pipeline / parallel axis is actually exercised at this small test size.
    out_tiled = hierarchy_block_forward(x, params_f32, block_batch=8)
    out_tiled = jax.block_until_ready(out_tiled)
    assert out_tiled.shape == (batch, num_classes), out_tiled.shape
    assert jnp.allclose(out_tiled, ref, atol=1e-4, rtol=1e-4), (
        float(jnp.max(jnp.abs(out_tiled - ref))))

    # bf16 matmul-input path (f32 accumulate): looser tolerance.
    params_bf16 = prepare_params(weights, biases, use_bf16=True)
    out_bf16 = hierarchy_block_forward(x, params_bf16)
    out_bf16 = jax.block_until_ready(out_bf16)
    assert out_bf16.shape == (batch, num_classes), out_bf16.shape
    assert jnp.allclose(out_bf16, ref, atol=1e-1, rtol=1e-1), (
        float(jnp.max(jnp.abs(out_bf16 - ref))))

    print("KERNEL_OK")
</pallas_src>

<mosaic_0001>
module attributes {stable_mosaic.version = 11 : i64} {
  func.func @_probe(%arg0: i32, %arg1: memref<8x128xf32, #tpu.memory_space<vmem>>, %arg2: memref<8x128xf32, #tpu.memory_space<vmem>>) attributes {dimension_semantics = [#tpu.dimension_semantics<arbitrary>], iteration_bounds = array<i64: 2>, scalar_prefetch = 0 : i64, scratch_operands = 0 : i64, tpu.core_type = #tpu.core_type<tc>, window_params = [{pipeline_mode = #tpu.pipeline_mode<synchronous>, transform_indices = @transform_0, window_bounds = array<i64: 8, 128>}, {transform_indices = @transform_1, window_bounds = array<i64: 8, 128>}]} {
    %c0 = arith.constant 0 : index
    %c0_0 = arith.constant 0 : index
    %0 = vector.load %arg1[%c0, %c0_0] : memref<8x128xf32, #tpu.memory_space<vmem>>, vector<8x128xf32>
    %cst = arith.constant 1.000000e+00 : f32
    %1 = vector.broadcast %cst : f32 to vector<8x128xf32>
    %2 = arith.addf %0, %1 : vector<8x128xf32>
    %c0_1 = arith.constant 0 : index
    %c0_2 = arith.constant 0 : index
    %3 = vector.load %arg2[%c0_1, %c0_2] : memref<8x128xf32, #tpu.memory_space<vmem>>, vector<8x128xf32>
    tpu.vector_store %arg2[%c0_1, %c0_2], %2 {strides = array<i32>} : memref<8x128xf32, #tpu.memory_space<vmem>>, vector<8x128xf32>,
    return
  }
  func.func @transform_0(%arg0: i32) -> (i32, i32) {
    %c0_i32 = arith.constant 0 : i32
    %c0_i32_0 = arith.constant 0 : i32
    %c0_i32_1 = arith.constant 0 : i32
    return %c0_i32, %c0_i32_0 : i32, i32
  }
  func.func @transform_1(%arg0: i32) -> (i32, i32) {
    %c0_i32 = arith.constant 0 : i32
    %c0_i32_0 = arith.constant 0 : i32
    return %arg0, %c0_i32 : i32, i32
  }
}

module attributes {stable_mosaic.version = 11 : i64} {
  func.func @_mlp_kernel(%arg0: i32, %arg1: memref<16x128xf32, #tpu.memory_space<vmem>>, %arg2: memref<128x128xf32, #tpu.memory_space<vmem>>, %arg3: memref<1x128xf32, #tpu.memory_space<vmem>>, %arg4: memref<128x128xf32, #tpu.memory_space<vmem>>, %arg5: memref<1x128xf32, #tpu.memory_space<vmem>>, %arg6: memref<128x128xf32, #tpu.memory_space<vmem>>, %arg7: memref<1x128xf32, #tpu.memory_space<vmem>>, %arg8: memref<16x128xf32, #tpu.memory_space<vmem>>) attributes {dimension_semantics = [#tpu.dimension_semantics<parallel>], iteration_bounds = array<i64: 1>, scalar_prefetch = 0 : i64, scratch_operands = 0 : i64, tpu.core_type = #tpu.core_type<tc>, window_params = [{transform_indices = @transform_0, window_bounds = array<i64: 16, 128>}, {pipeline_mode = #tpu.pipeline_mode<synchronous>, transform_indices = @transform_1, window_bounds = array<i64: 128, 128>}, {pipeline_mode = #tpu.pipeline_mode<synchronous>, transform_indices = @transform_2, window_bounds = array<i64: 1, 128>}, {pipeline_mode = #tpu.pipeline_mode<synchronous>, transform_indices = @transform_3, window_bounds = array<i64: 128, 128>}, {pipeline_mode = #tpu.pipeline_mode<synchronous>, transform_indices = @transform_4, window_bounds = array<i64: 1, 128>}, {pipeline_mode = #tpu.pipeline_mode<synchronous>, transform_indices = @transform_5, window_bounds = array<i64: 128, 128>}, {pipeline_mode = #tpu.pipeline_mode<synchronous>, transform_indices = @transform_6, window_bounds = array<i64: 1, 128>}, {transform_indices = @transform_7, window_bounds = array<i64: 16, 128>}]} {
    %c0 = arith.constant 0 : index
    %c0_0 = arith.constant 0 : index
    %0 = vector.load %arg1[%c0, %c0_0] : memref<16x128xf32, #tpu.memory_space<vmem>>, vector<16x128xf32>
    %c0_1 = arith.constant 0 : index
    %c0_2 = arith.constant 0 : index
    %1 = vector.load %arg2[%c0_1, %c0_2] : memref<128x128xf32, #tpu.memory_space<vmem>>, vector<128x128xf32>
    %cst = arith.constant dense<0.000000e+00> : vector<16x128xf32>
    %2 = tpu.matmul %0, %1, %cst {dimension_numbers = #tpu.dot_dimension_numbers<[1], [0], [0], [1], [0, 0, 1, 1], [], []>} : vector<16x128xf32>, vector<128x128xf32>, vector<16x128xf32> -> vector<16x128xf32>
    %c0_3 = arith.constant 0 : index
    %c0_4 = arith.constant 0 : index
    %3 = vector.load %arg3[%c0_3, %c0_4] : memref<1x128xf32, #tpu.memory_space<vmem>>, vector<1x128xf32>
    %4 = vector.broadcast %3 : vector<1x128xf32> to vector<16x128xf32>
    %5 = arith.addf %2, %4 : vector<16x128xf32>
    %cst_5 = arith.constant 0.000000e+00 : f32
    %6 = vector.broadcast %cst_5 : f32 to vector<16x128xf32>
    %7 = arith.maximumf %5, %6 : vector<16x128xf32>
    %c0_6 = arith.constant 0 : index
    %c0_7 = arith.constant 0 : index
    %8 = vector.load %arg4[%c0_6, %c0_7] : memref<128x128xf32, #tpu.memory_space<vmem>>, vector<128x128xf32>
    %cst_8 = arith.constant dense<0.000000e+00> : vector<16x128xf32>
    %9 = tpu.matmul %7, %8, %cst_8 {dimension_numbers = #tpu.dot_dimension_numbers<[1], [0], [0], [1], [0, 0, 1, 1], [], []>} : vector<16x128xf32>, vector<128x128xf32>, vector<16x128xf32> -> vector<16x128xf32>
    %c0_9 = arith.constant 0 : index
    %c0_10 = arith.constant 0 : index
    %10 = vector.load %arg5[%c0_9, %c0_10] : memref<1x128xf32, #tpu.memory_space<vmem>>, vector<1x128xf32>
    %11 = vector.broadcast %10 : vector<1x128xf32> to vector<16x128xf32>
    %12 = arith.addf %9, %11 : vector<16x128xf32>
    %cst_11 = arith.constant 0.000000e+00 : f32
    %13 = vector.broadcast %cst_11 : f32 to vector<16x128xf32>
    %14 = arith.maximumf %12, %13 : vector<16x128xf32>
    %c0_12 = arith.constant 0 : index
    %c0_13 = arith.constant 0 : index
    %15 = vector.load %arg6[%c0_12, %c0_13] : memref<128x128xf32, #tpu.memory_space<vmem>>, vector<128x128xf32>
    %cst_14 = arith.constant dense<0.000000e+00> : vector<16x128xf32>
    %16 = tpu.matmul %14, %15, %cst_14 {dimension_numbers = #tpu.dot_dimension_numbers<[1], [0], [0], [1], [0, 0, 1, 1], [], []>} : vector<16x128xf32>, vector<128x128xf32>, vector<16x128xf32> -> vector<16x128xf32>
    %c0_15 = arith.constant 0 : index
    %c0_16 = arith.constant 0 : index
    %17 = vector.load %arg7[%c0_15, %c0_16] : memref<1x128xf32, #tpu.memory_space<vmem>>, vector<1x128xf32>
    %18 = vector.broadcast %17 : vector<1x128xf32> to vector<16x128xf32>
    %19 = arith.addf %16, %18 : vector<16x128xf32>
    %c0_17 = arith.constant 0 : index
    %c0_18 = arith.constant 0 : index
    %20 = vector.load %arg8[%c0_17, %c0_18] : memref<16x128xf32, #tpu.memory_space<vmem>>, vector<16x128xf32>
    tpu.vector_store %arg8[%c0_17, %c0_18], %19 {strides = array<i32>} : memref<16x128xf32, #tpu.memory_space<vmem>>, vector<16x128xf32>,
    return
  }
  func.func @transform_0(%arg0: i32) -> (i32, i32) {
    %c0_i32 = arith.constant 0 : i32
    %c0_i32_0 = arith.constant 0 : i32
    return %arg0, %c0_i32 : i32, i32
  }
  func.func @transform_1(%arg0: i32) -> (i32, i32) {
    %c0_i32 = arith.constant 0 : i32
    %c0_i32_0 = arith.constant 0 : i32
    %c0_i32_1 = arith.constant 0 : i32
    return %c0_i32, %c0_i32_0 : i32, i32
  }
  func.func @transform_2(%arg0: i32) -> (i32, i32) {
    %c0_i32 = arith.constant 0 : i32
    %c0_i32_0 = arith.constant 0 : i32
    %c0_i32_1 = arith.constant 0 : i32
    return %c0_i32, %c0_i32_0 : i32, i32
  }
  func.func @transform_3(%arg0: i32) -> (i32, i32) {
    %c0_i32 = arith.constant 0 : i32
    %c0_i32_0 = arith.constant 0 : i32
    %c0_i32_1 = arith.constant 0 : i32
    return %c0_i32, %c0_i32_0 : i32, i32
  }
  func.func @transform_4(%arg0: i32) -> (i32, i32) {
    %c0_i32 = arith.constant 0 : i32
    %c0_i32_0 = arith.constant 0 : i32
    %c0_i32_1 = arith.constant 0 : i32
    return %c0_i32, %c0_i32_0 : i32, i32
  }
  func.func @transform_5(%arg0: i32) -> (i32, i32) {
    %c0_i32 = arith.constant 0 : i32
    %c0_i32_0 = arith.constant 0 : i32
    %c0_i32_1 = arith.constant 0 : i32
    return %c0_i32, %c0_i32_0 : i32, i32
  }
  func.func @transform_6(%arg0: i32) -> (i32, i32) {
    %c0_i32 = arith.constant 0 : i32
    %c0_i32_0 = arith.constant 0 : i32
    %c0_i32_1 = arith.constant 0 : i32
    return %c0_i32, %c0_i32_0 : i32, i32
  }
  func.func @transform_7(%arg0: i32) -> (i32, i32) {
    %c0_i32 = arith.constant 0 : i32
    %c0_i32_0 = arith.constant 0 : i32
    return %arg0, %c0_i32 : i32, i32
  }
}

</mosaic_0001>

<llo_original>
// kernel: tpu_custom_call.1
$region0: #{tpu_custom_call.1}
  #allocation0 [shape = 'u32[]', space=smem, size = 0x4, offset = 0x4, fixed_abs, tag = 'smem constant byte address 0x4 - core index']
  #allocation1 [shape = 'u32[144,128]{1,0:T(1,128)}', space=vmem, size = 0x12000, scoped, tag = 'internal scratch']
  %s0 = inlined_call_operand.hbm [shape: f32[8,128], index: 0, kind: input, shape index: {}]
  %s1 = inlined_call_operand.hbm [shape: f32[16,128], index: 1, kind: output, shape index: {}]
  %s2 = sld [smem:[#allocation0]]
  $region41: #{tpu_custom_call.1} parent=0
    _
  %s4 = ssub.s32 1, %s2
  %s5 = scalar_select 0, %s4, %s2
  $region1: #{tpu_custom_call.1} parent=0
    #allocation2 [shape = 'u8[4096]{0}', space=vmem, size = 0x1000, scoped, tag = 'input window, operand 0, single buffered']
    #allocation3 [shape = 's32[2]{0}', space=sflag, size = 0x8, scoped, tag = 'scoped memory for tpu_custom_call.1']
    #allocation4 [shape = 's32[2]{0}', space=sflag, size = 0x8, scoped, tag = 'scoped memory for tpu_custom_call.1']
    #allocation5 [shape = 'u8[8192]{0}', space=vmem, size = 0x2000, scoped, tag = 'output window, operand 0']
    %6 = vsyncpa [#allocation3], 0
    %7 = vsyncpa [#allocation4], 0
    %s8 = scalar_lea.sflag [#allocation4], 1
    %9 = vsyncpa %s8, 0
    loop: start=0, step=1, limit=4
    $region2: #{tpu_custom_call.1} parent=1 // loop_pre_header
      _
    $region3: #{tpu_custom_call.1} parent=1 // loop_header
      %s11 = sphi 0, %s15
      %p12 = scmp.ge.s32.totalorder %s11, 4
      %s19 = sphi 0, %s19
      %s21 = sphi 0, %s19
      %s22 = sphi 0, %s21
      %s36 = sphi 0, %s22
      %s42 = sphi 0, %s44
      %s45 = sphi 0, %s42
      %s46 = sphi 0, %s45
      %s62 = sphi 0, %s46
    $region4: #{tpu_custom_call.1} parent=1 // loop_header_branch
      %14 = sbr.rel (%p12) target = $region8
    $region5: #{tpu_custom_call.1} parent=1 // loop_body
      %s16 = ssub.s32 %s11, 1
      %s17 = ssub.s32 %s11, 2
      %s18 = sadd.s32 %s11, 1
      %s20 = sadd.s32 %s19, 1
      %p23 = scmp.eq.s32.totalorder %s11, 1
      %p24 = scmp.ne.s32.totalorder %s19, %s21
      %p25 = scmp.eq.s32.totalorder %s11, 0
      %p26 = por %p24, %p25
      %p27 = scmp.ne.s32.totalorder %s19, %s21
      %p28 = scmp.eq.s32.totalorder %s16, 1
      %p29 = por %p27, %p28
      %p30 = scmp.ne.s32.totalorder %s21, %s22
      %p31 = scmp.eq.s32.totalorder %s16, 0
      %p32 = por %p30, %p31
      %p33 = scmp.ne.s32.totalorder %s21, %s22
      %p34 = scmp.eq.s32.totalorder %s17, 1
      %p35 = por %p33, %p34
      %p37 = scmp.ne.s32.totalorder %s22, %s36
      %p38 = scmp.eq.s32.totalorder %s17, 0
      %p39 = por %p37, %p38
      %s40 = ssub.s32 %s11, %s18
      %p41 = scmp.eq.s32.totalorder %s40, 0
      %s43 = sadd.s32 %s42, 1
      %s44 = scalar_select %p41, %s42, %s43
      %p47 = pneg %p41
      %p48 = scmp.eq.s32.totalorder %s11, 1
      %p49 = por %p47, %p48
      %p50 = scmp.ne.s32.totalorder %s42, %s45
      %p51 = scmp.eq.s32.totalorder %s11, 0
      %p52 = por %p50, %p51
      %p53 = scmp.ne.s32.totalorder %s42, %s45
      %p54 = scmp.eq.s32.totalorder %s16, 1
      %p55 = por %p53, %p54
      %p56 = scmp.ne.s32.totalorder %s45, %s46
      %p57 = scmp.eq.s32.totalorder %s16, 0
      %p58 = por %p56, %p57
      %p59 = scmp.ne.s32.totalorder %s45, %s46
      %p60 = scmp.eq.s32.totalorder %s17, 1
      %p61 = por %p59, %p60
      %p63 = scmp.ne.s32.totalorder %s46, %s62
      %p64 = scmp.eq.s32.totalorder %s17, 0
      %p65 = por %p63, %p64
      %p66 = scmp.le.s32.totalorder 1, %s11
      %p67 = scmp.lt.s32.totalorder %s11, 3
      %p68 = pnand %p66, %p67
      %p69 = pneg %p68
      // Predicated region
      $region9: #{tpu_custom_call.1} parent=5 // pred_check
        _
      $region10: #{tpu_custom_call.1} parent=5 // pred_check_branch
        %71 = sbr.rel (%p68) target = $region12
      $region11: #{tpu_custom_call.1} parent=5 // pred_region
        %s72 = ssub.s32 %s11, 1
        // Predicated region
        $region13: #{tpu_custom_call.1} parent=11 // pred_check
          %p73 = pneg %p32
        $region14: #{tpu_custom_call.1} parent=11 // pred_check_branch
          %75 = sbr.rel (%p73) target = $region16
        $region15: #{tpu_custom_call.1} parent=11 // pred_region
          %s77 = ssub.s32 128, 128
          %78 = vsyncadd [#allocation3], %s77
          %s80 = sshll.u32 [#allocation2], 4
          %s81 = int_to_ptr.vmem [resolvable:$true] %s80
          %83 = dma.hbm_to_vmem [thread:$0]  %s0, 128, %s81, [#allocation3]
        $region16: #{tpu_custom_call.1} parent=11 // pred_fallthru
          _
      $region12: #{tpu_custom_call.1} parent=5 // pred_fallthru
        _
      %p84 = scmp.lt.s32.totalorder %s11, 2
      // Predicated region
      $region17: #{tpu_custom_call.1} parent=5 // pred_check
        %p85 = pneg %p84
      $region18: #{tpu_custom_call.1} parent=5 // pred_check_branch
        %87 = sbr.rel (%p85) target = $region20
      $region19: #{tpu_custom_call.1} parent=5 // pred_region
        _
      $region20: #{tpu_custom_call.1} parent=5 // pred_fallthru
        _
      %p88 = scmp.le.s32.totalorder 1, %s11
      %p89 = scmp.lt.s32.totalorder %s11, 3
      %p90 = pnand %p88, %p89
      %p91 = pneg %p90
      // Predicated region
      $region21: #{tpu_custom_call.1} parent=5 // pred_check
        _
      $region22: #{tpu_custom_call.1} parent=5 // pred_check_branch
        %93 = sbr.rel (%p90) target = $region24
      $region23: #{tpu_custom_call.1} parent=5 // pred_region
        %s94 = ssub.s32 %s11, 1
        // Predicated region
        $region25: #{tpu_custom_call.1} parent=23 // pred_check
          %p95 = pneg %p32
        $region26: #{tpu_custom_call.1} parent=23 // pred_check_branch
          %97 = sbr.rel (%p95) target = $region28
        $region27: #{tpu_custom_call.1} parent=23 // pred_region
          %98 = dma.done [#allocation3], 128
        $region28: #{tpu_custom_call.1} parent=23 // pred_fallthru
          _
        %p99 = pneg %p32
        %p100 = pneg %p29
        %p101 = pneg %p58
        %p102 = pneg %p55
        %s103 = sand.u32 %s45, 1
        %s104 = scalar_lea.sflag [#allocation4], %s103
        %s105 = sand.u32 %s45, 1
        %s106 = smul.addr %s105, 8
        %s107 = scalar_lea.vmem [#allocation5], %s106
        %v108 = vld [vmem:[#allocation2] sm:$0xff]
        %v109 = vadd.f32 %v108, 1.0
        %110 = vst [vmem:[%s107] sm:$0xff] %v109
        %s111 = sand.u32 %s45, 1
        %s112 = scalar_lea.sflag [#allocation4], %s111
        %s113 = sand.u32 %s45, 1
        %s114 = smul.addr %s113, 8
        %s115 = scalar_lea.vmem [#allocation5], %s114
        // Predicated region
        $region29: #{tpu_custom_call.1} parent=23 // pred_check
          %p116 = pneg %p55
        $region30: #{tpu_custom_call.1} parent=23 // pred_check_branch
          %118 = sbr.rel (%p116) target = $region32
        $region31: #{tpu_custom_call.1} parent=23 // pred_region
          %s120 = ssub.s32 128, 128
          %121 = vsyncadd %s112, %s120
          %s122 = smul.addr %s16, 128
          %s123 = scalar_lea.hbm %s1, %s122
          %s125 = sshll.u32 %s115, 4
          %s126 = int_to_ptr.vmem [resolvable:$true] %s125
          %128 = dma.vmem_to_hbm [thread:$0]  %s126, 128, %s123, %s112
        $region32: #{tpu_custom_call.1} parent=23 // pred_fallthru
          _
      $region24: #{tpu_custom_call.1} parent=5 // pred_fallthru
        _
      %p129 = scmp.le.s32.totalorder 2, %s11
      // Predicated region
      $region33: #{tpu_custom_call.1} parent=5 // pred_check
        %p130 = pneg %p129
      $region34: #{tpu_custom_call.1} parent=5 // pred_check_branch
        %132 = sbr.rel (%p130) target = $region36
      $region35: #{tpu_custom_call.1} parent=5 // pred_region
        %s133 = ssub.s32 %s11, 2
        // Predicated region
        $region37: #{tpu_custom_call.1} parent=35 // pred_check
          %p134 = pneg %p61
        $region38: #{tpu_custom_call.1} parent=35 // pred_check_branch
          %136 = sbr.rel (%p134) target = $region40
        $region39: #{tpu_custom_call.1} parent=35 // pred_region
          %s137 = sand.u32 %s46, 1
          %s138 = scalar_lea.sflag [#allocation4], %s137
          %s139 = sand.u32 %s46, 1
          %s140 = smul.addr %s139, 8
          %s141 = scalar_lea.vmem [#allocation5], %s140
          %142 = dma.done %s138, 128
        $region40: #{tpu_custom_call.1} parent=35 // pred_fallthru
          _
      $region36: #{tpu_custom_call.1} parent=5 // pred_fallthru
        _
    $region6: #{tpu_custom_call.1} parent=1 // loop_footer
      %s15 = sadd.s32 1, %s11
    $region7: #{tpu_custom_call.1} parent=1 // loop_footer_branch
      %10 = sbr.rel target = $region3
    $region8: #{tpu_custom_call.1} parent=1 // loop_exit
      _
    %143 = vsyncpa [#allocation3], 1
    %s144 = scalar_lea.sflag [#allocation3], 1
    %145 = vsyncpa %s144, 1
    %146 = vsyncpa [#allocation4], 1
    %s147 = scalar_lea.sflag [#allocation4], 1
    %148 = vsyncpa %s147, 1

// kernel: tpu_custom_call.1
$region0: #{tpu_custom_call.1}
  #allocation0 [shape = 'u32[]', space=smem, size = 0x4, offset = 0x4, fixed_abs, tag = 'smem constant byte address 0x4 - core index']
  #allocation1 [shape = 'u32[144,128]{1,0:T(1,128)}', space=vmem, size = 0x12000, scoped, tag = 'internal scratch']
  %s0 = inlined_call_operand.hbm [shape: f32[16,128], index: 0, kind: input, shape index: {}]
  %s1 = inlined_call_operand.hbm [shape: f32[128,128], index: 1, kind: input, shape index: {}]
  %s2 = inlined_call_operand.vmem [shape: f32[1,128], index: 2, kind: input, shape index: {}]
  %s3 = inlined_call_operand.hbm [shape: f32[128,128], index: 3, kind: input, shape index: {}]
  %s4 = inlined_call_operand.vmem [shape: f32[1,128], index: 4, kind: input, shape index: {}]
  %s5 = inlined_call_operand.hbm [shape: f32[128,128], index: 5, kind: input, shape index: {}]
  %s6 = inlined_call_operand.vmem [shape: f32[1,128], index: 6, kind: input, shape index: {}]
  %s7 = inlined_call_operand.hbm [shape: f32[16,128], index: 7, kind: output, shape index: {}]
  %s8 = sld [smem:[#allocation0]]
  $region54: #{tpu_custom_call.1} parent=0
    _
  %s10 = ssub.s32 1, %s8
  %s11 = scalar_select 0, %s10, %s8
  $region1: #{tpu_custom_call.1} parent=0
    #allocation2 [shape = 'u8[8192]{0}', space=vmem, size = 0x2000, scoped, tag = 'input window, operand 0, single buffered']
    #allocation3 [shape = 's32[1]{0}', space=sflag, size = 0x4, scoped, tag = 'scoped memory for tpu_custom_call.1']
    #allocation4 [shape = 's32[1]{0}', space=sflag, size = 0x4, scoped, tag = 'scoped memory for tpu_custom_call.1']
    #allocation5 [shape = 'u8[65536]{0}', space=vmem, size = 0x10000, scoped, tag = 'input window, operand 1, single buffered']
    #allocation6 [shape = 's32[1]{0}', space=sflag, size = 0x4, scoped, tag = 'scoped memory for tpu_custom_call.1']
    #allocation7 [shape = 'u8[65536]{0}', space=vmem, size = 0x10000, scoped, tag = 'input window, operand 3, single buffered']
    #allocation8 [shape = 'u8[65536]{0}', space=vmem, size = 0x10000, scoped, tag = 'input window, operand 5, single buffered']
    #allocation9 [shape = 's32[1]{0}', space=sflag, size = 0x4, scoped, tag = 'scoped memory for tpu_custom_call.1']
    #allocation10 [shape = 'u8[8192]{0}', space=vmem, size = 0x2000, scoped, tag = 'output window, operand 0, single buffered']
    %12 = vsyncpa [#allocation3], 0
    %13 = vsyncpa [#allocation6], 0
    %14 = vsyncpa [#allocation9], 0
    %15 = vsyncpa [#allocation4], 0
    // Predicated region
    $region2: #{tpu_custom_call.1} parent=1 // pred_check
      _
    $region3: #{tpu_custom_call.1} parent=1 // pred_check_branch
      %17 = sbr.rel (0) target = $region5
    $region4: #{tpu_custom_call.1} parent=1 // pred_region
      %s19 = ssub.s32 256, 256
      %20 = vsyncadd [#allocation3], %s19
      %s21 = sshll.u32 [#allocation2], 4
      %s22 = int_to_ptr.vmem [resolvable:$true] %s21
      %27 = dma.hbm_to_vmem [thread:$0]  %s0, 256, %s22, [#allocation3], 128, 128, 8
    $region5: #{tpu_custom_call.1} parent=1 // pred_fallthru
      _
    // Predicated region
    $region6: #{tpu_custom_call.1} parent=1 // pred_check
      _
    $region7: #{tpu_custom_call.1} parent=1 // pred_check_branch
      %29 = sbr.rel (0) target = $region9
    $region8: #{tpu_custom_call.1} parent=1 // pred_region
      %s31 = ssub.s32 2048, 2048
      %32 = vsyncadd [#allocation6], %s31
      %s33 = sshll.u32 [#allocation5], 4
      %s34 = int_to_ptr.vmem [resolvable:$true] %s33
      %39 = dma.hbm_to_vmem [thread:$0]  %s1, 2048, %s34, [#allocation6], 128, 128, 8
    $region9: #{tpu_custom_call.1} parent=1 // pred_fallthru
      _
    // Predicated region
    $region10: #{tpu_custom_call.1} parent=1 // pred_check
      _
    $region11: #{tpu_custom_call.1} parent=1 // pred_check_branch
      %41 = sbr.rel (0) target = $region13
    $region12: #{tpu_custom_call.1} parent=1 // pred_region
      _
    $region13: #{tpu_custom_call.1} parent=1 // pred_fallthru
      _
    // Predicated region
    $region14: #{tpu_custom_call.1} parent=1 // pred_check
      _
    $region15: #{tpu_custom_call.1} parent=1 // pred_check_branch
      %43 = sbr.rel (0) target = $region17
    $region16: #{tpu_custom_call.1} parent=1 // pred_region
      %s45 = ssub.s32 2048, 2048
      %46 = vsyncadd [#allocation6], %s45
      %s47 = sshll.u32 [#allocation7], 4
      %s48 = int_to_ptr.vmem [resolvable:$true] %s47
      %53 = dma.hbm_to_vmem [thread:$0]  %s3, 2048, %s48, [#allocation6], 128, 128, 8
    $region17: #{tpu_custom_call.1} parent=1 // pred_fallthru
      _
    // Predicated region
    $region18: #{tpu_custom_call.1} parent=1 // pred_check
      _
    $region19: #{tpu_custom_call.1} parent=1 // pred_check_branch
      %55 = sbr.rel (0) target = $region21
    $region20: #{tpu_custom_call.1} parent=1 // pred_region
      _
    $region21: #{tpu_custom_call.1} parent=1 // pred_fallthru
      _
    // Predicated region
    $region22: #{tpu_custom_call.1} parent=1 // pred_check
      _
    $region23: #{tpu_custom_call.1} parent=1 // pred_check_branch
      %57 = sbr.rel (0) target = $region25
    $region24: #{tpu_custom_call.1} parent=1 // pred_region
      %s59 = ssub.s32 2048, 2048
      %60 = vsyncadd [#allocation9], %s59
      %s61 = sshll.u32 [#allocation8], 4
      %s62 = int_to_ptr.vmem [resolvable:$true] %s61
      %67 = dma.hbm_to_vmem [thread:$0]  %s5, 2048, %s62, [#allocation9], 128, 128, 8
    $region25: #{tpu_custom_call.1} parent=1 // pred_fallthru
      _
    // Predicated region
    $region26: #{tpu_custom_call.1} parent=1 // pred_check
      _
    $region27: #{tpu_custom_call.1} parent=1 // pred_check_branch
      %69 = sbr.rel (0) target = $region29
    $region28: #{tpu_custom_call.1} parent=1 // pred_region
      _
    $region29: #{tpu_custom_call.1} parent=1 // pred_fallthru
      _
    // Predicated region
    $region30: #{tpu_custom_call.1} parent=1 // pred_check
      _
    $region31: #{tpu_custom_call.1} parent=1 // pred_check_branch
      %71 = sbr.rel (0) target = $region33
    $region32: #{tpu_custom_call.1} parent=1 // pred_region
      %72 = dma.done [#allocation3], 256
    $region33: #{tpu_custom_call.1} parent=1 // pred_fallthru
      _
    // Predicated region
    $region34: #{tpu_custom_call.1} parent=1 // pred_check
      _
    $region35: #{tpu_custom_call.1} parent=1 // pred_check_branch
      %74 = sbr.rel (0) target = $region37
    $region36: #{tpu_custom_call.1} parent=1 // pred_region
      %75 = dma.done [#allocation6], 2048
    $region37: #{tpu_custom_call.1} parent=1 // pred_fallthru
      _
    // Predicated region
    $region38: #{tpu_custom_call.1} parent=1 // pred_check
      _
    $region39: #{tpu_custom_call.1} parent=1 // pred_check_branch
      %77 = sbr.rel (0) target = $region41
    $region40: #{tpu_custom_call.1} parent=1 // pred_region
      %78 = dma.done [#allocation6], 2048
    $region41: #{tpu_custom_call.1} parent=1 // pred_fallthru
      _
    // Predicated region
    $region42: #{tpu_custom_call.1} parent=1 // pred_check
      _
    $region43: #{tpu_custom_call.1} parent=1 // pred_check_branch
      %80 = sbr.rel (0) target = $region45
    $region44: #{tpu_custom_call.1} parent=1 // pred_region
      %81 = dma.done [#allocation9], 2048
    $region45: #{tpu_custom_call.1} parent=1 // pred_fallthru
      _
    %v82 = vld [vmem:[#allocation2] sm:$0xff]
    %v83 = vld [vmem:[#allocation2 + $0x8] sm:$0xff]
    %v84 = vld [vmem:[#allocation5] sm:$0xff]
    %v85 = vld [vmem:[#allocation5 + $0x8] sm:$0xff]
    %v86 = vld [vmem:[#allocation5 + $0x10] sm:$0xff]
    %v87 = vld [vmem:[#allocation5 + $0x18] sm:$0xff]
    %v88 = vld [vmem:[#allocation5 + $0x20] sm:$0xff]
    %v89 = vld [vmem:[#allocation5 + $0x28] sm:$0xff]
    %v90 = vld [vmem:[#allocation5 + $0x30] sm:$0xff]
    %v91 = vld [vmem:[#allocation5 + $0x38] sm:$0xff]
    %v92 = vld [vmem:[#allocation5 + $0x40] sm:$0xff]
    %v93 = vld [vmem:[#allocation5 + $0x48] sm:$0xff]
    %v94 = vld [vmem:[#allocation5 + $0x50] sm:$0xff]
    %v95 = vld [vmem:[#allocation5 + $0x58] sm:$0xff]
    %v96 = vld [vmem:[#allocation5 + $0x60] sm:$0xff]
    %v97 = vld [vmem:[#allocation5 + $0x68] sm:$0xff]
    %v98 = vld [vmem:[#allocation5 + $0x70] sm:$0xff]
    %v99 = vld [vmem:[#allocation5 + $0x78] sm:$0xff]
    %v100 = vld [vmem:[%s2] sm:$0x1]
    %v102 = vlaneseq
    %v103 = vshrl.u32 %v102, 7
    %v104 = vsub.s32 0, %v103
    %v105 = vrot.slane %v100, %v104
    %107 = vmatprep.subr.mxu0 0.0
    %108 = vmatpush1.msra.mxu0 %v84
    %109 = vmatprep.subr.mxu0 0.0
    %110 = vmatpush1.msra.mxu0 %v85
    %111 = vmatprep.subr.mxu0 0.0
    %112 = vmatpush1.msra.mxu0 %v86
    %113 = vmatprep.subr.mxu0 0.0
    %114 = vmatpush1.msra.mxu0 %v87
    %115 = vmatprep.subr.mxu0 0.0
    %116 = vmatpush1.msra.mxu0 %v88
    %117 = vmatprep.subr.mxu0 0.0
    %118 = vmatpush1.msra.mxu0 %v89
    %119 = vmatprep.subr.mxu0 0.0
    %120 = vmatpush1.msra.mxu0 %v90
    %121 = vmatprep.subr.mxu0 0.0
    %122 = vmatpush1.msra.mxu0 %v91
    %123 = vmatprep.subr.mxu0 0.0
    %124 = vmatpush1.msra.mxu0 %v92
    %125 = vmatprep.subr.mxu0 0.0
    %126 = vmatpush1.msra.mxu0 %v93
    %127 = vmatprep.subr.mxu0 0.0
    %128 = vmatpush1.msra.mxu0 %v94
    %129 = vmatprep.subr.mxu0 0.0
    %130 = vmatpush1.msra.mxu0 %v95
    %131 = vmatprep.subr.mxu0 0.0
    %132 = vmatpush1.msra.mxu0 %v96
    %133 = vmatprep.subr.mxu0 0.0
    %134 = vmatpush1.msra.mxu0 %v97
    %135 = vmatprep.subr.mxu0 0.0
    %136 = vmatpush1.msra.mxu0 %v98
    %137 = vmatprep.subr.mxu0 0.0
    %138 = vmatpush1.msra.mxu0 %v99
    %139 = vmatprep.subr.mxu0 0.0
    %140 = vmatpush1.msra.mxu0 0.0
    %141 = vmatprep.subr.mxu0 0.0
    %142 = vmatpush1.msra.mxu0 0.0
    %143 = vmatprep.subr.mxu0 0.0
    %144 = vmatpush1.msra.mxu0 0.0
    %145 = vmatprep.subr.mxu0 0.0
    %146 = vmatpush1.msra.mxu0 0.0
    %147 = vmatprep.subr.mxu0 0.0
    %148 = vmatpush1.msra.mxu0 0.0
    %149 = vmatprep.subr.mxu0 0.0
    %150 = vmatpush1.msra.mxu0 0.0
    %151 = vmatprep.subr.mxu0 0.0
    %152 = vmatpush1.msra.mxu0 0.0
    %153 = vmatprep.subr.mxu0 0.0
    %154 = vmatpush1.msra.mxu0 0.0
    %155 = vmatprep.subr.mxu0 0.0
    %156 = vmatpush1.msra.mxu0 0.0
    %157 = vmatprep.subr.mxu0 0.0
    %158 = vmatpush1.msra.mxu0 0.0
    %159 = vmatprep.subr.mxu0 0.0
    %160 = vmatpush1.msra.mxu0 0.0
    %161 = vmatprep.subr.mxu0 0.0
    %162 = vmatpush1.msra.mxu0 0.0
    %163 = vmatprep.subr.mxu0 0.0
    %164 = vmatpush1.msra.mxu0 0.0
    %165 = vmatprep.subr.mxu0 0.0
    %166 = vmatpush1.msra.mxu0 0.0
    %167 = vmatprep.subr.mxu0 0.0
    %168 = vmatpush1.msra.mxu0 0.0
    %169 = vmatprep.subr.mxu0 0.0
    %170 = vmatpush1.msra.mxu0 0.0
    %171 = vmatprep.mubr.f32.mxu0 0.0
    %172 = vmatmul.mubr.f32.gmra.mrb[0].mxu0 %v82
    %v173 = vpop.f32.mrb[0].mxu0
    %v174 = vadd.f32 %v105, %v173
    %v175 = vpop.f32.mrb[0].mxu0
    %176 = vmatprep.mubr.f32.mxu0 0.0
    %177 = vmatmul.mubr.f32.gmra.mrb[0].mxu0 %v83
    %v178 = vpop.f32.mrb[0].mxu0
    %v179 = vadd.f32 %v105, %v178
    %v180 = vpop.f32.mrb[0].mxu0
    %181 = vdwg.mxu0
    %v182 = vmax.f32 %v174, 0.0
    %v183 = vmax.f32 %v179, 0.0
    %v184 = vld [vmem:[#allocation7] sm:$0xff]
    %v185 = vld [vmem:[#allocation7 + $0x8] sm:$0xff]
    %v186 = vld [vmem:[#allocation7 + $0x10] sm:$0xff]
    %v187 = vld [vmem:[#allocation7 + $0x18] sm:$0xff]
    %v188 = vld [vmem:[#allocation7 + $0x20] sm:$0xff]
    %v189 = vld [vmem:[#allocation7 + $0x28] sm:$0xff]
    %v190 = vld [vmem:[#allocation7 + $0x30] sm:$0xff]
    %v191 = vld [vmem:[#allocation7 + $0x38] sm:$0xff]
    %v192 = vld [vmem:[#allocation7 + $0x40] sm:$0xff]
    %v193 = vld [vmem:[#allocation7 + $0x48] sm:$0xff]
    %v194 = vld [vmem:[#allocation7 + $0x50] sm:$0xff]
    %v195 = vld [vmem:[#allocation7 + $0x58] sm:$0xff]
    %v196 = vld [vmem:[#allocation7 + $0x60] sm:$0xff]
    %v197 = vld [vmem:[#allocation7 + $0x68] sm:$0xff]
    %v198 = vld [vmem:[#allocation7 + $0x70] sm:$0xff]
    %v199 = vld [vmem:[#allocation7 + $0x78] sm:$0xff]
    %v200 = vld [vmem:[%s4] sm:$0x1]
    %v202 = vlaneseq
    %v203 = vshrl.u32 %v202, 7
    %v204 = vsub.s32 0, %v203
    %v205 = vrot.slane %v200, %v204
    %207 = vmatprep.subr.mxu0 0.0
    %208 = vmatpush1.msra.mxu0 %v184
    %209 = vmatprep.subr.mxu0 0.0
    %210 = vmatpush1.msra.mxu0 %v185
    %211 = vmatprep.subr.mxu0 0.0
    %212 = vmatpush1.msra.mxu0 %v186
    %213 = vmatprep.subr.mxu0 0.0
    %214 = vmatpush1.msra.mxu0 %v187
    %215 = vmatprep.subr.mxu0 0.0
    %216 = vmatpush1.msra.mxu0 %v188
    %217 = vmatprep.subr.mxu0 0.0
    %218 = vmatpush1.msra.mxu0 %v189
    %219 = vmatprep.subr.mxu0 0.0
    %220 = vmatpush1.msra.mxu0 %v190
    %221 = vmatprep.subr.mxu0 0.0
    %222 = vmatpush1.msra.mxu0 %v191
    %223 = vmatprep.subr.mxu0 0.0
    %224 = vmatpush1.msra.mxu0 %v192
    %225 = vmatprep.subr.mxu0 0.0
    %226 = vmatpush1.msra.mxu0 %v193
    %227 = vmatprep.subr.mxu0 0.0
    %228 = vmatpush1.msra.mxu0 %v194
    %229 = vmatprep.subr.mxu0 0.0
    %230 = vmatpush1.msra.mxu0 %v195
    %231 = vmatprep.subr.mxu0 0.0
    %232 = vmatpush1.msra.mxu0 %v196
    %233 = vmatprep.subr.mxu0 0.0
    %234 = vmatpush1.msra.mxu0 %v197
    %235 = vmatprep.subr.mxu0 0.0
    %236 = vmatpush1.msra.mxu0 %v198
    %237 = vmatprep.subr.mxu0 0.0
    %238 = vmatpush1.msra.mxu0 %v199
    %239 = vmatprep.subr.mxu0 0.0
    %240 = vmatpush1.msra.mxu0 0.0
    %241 = vmatprep.subr.mxu0 0.0
    %242 = vmatpush1.msra.mxu0 0.0
    %243 = vmatprep.subr.mxu0 0.0
    %244 = vmatpush1.msra.mxu0 0.0
    %245 = vmatprep.subr.mxu0 0.0
    %246 = vmatpush1.msra.mxu0 0.0
    %247 = vmatprep.subr.mxu0 0.0
    %248 = vmatpush1.msra.mxu0 0.0
    %249 = vmatprep.subr.mxu0 0.0
    %250 = vmatpush1.msra.mxu0 0.0
    %251 = vmatprep.subr.mxu0 0.0
    %252 = vmatpush1.msra.mxu0 0.0
    %253 = vmatprep.subr.mxu0 0.0
    %254 = vmatpush1.msra.mxu0 0.0
    %255 = vmatprep.subr.mxu0 0.0
    %256 = vmatpush1.msra.mxu0 0.0
    %257 = vmatprep.subr.mxu0 0.0
    %258 = vmatpush1.msra.mxu0 0.0
    %259 = vmatprep.subr.mxu0 0.0
    %260 = vmatpush1.msra.mxu0 0.0
    %261 = vmatprep.subr.mxu0 0.0
    %262 = vmatpush1.msra.mxu0 0.0
    %263 = vmatprep.subr.mxu0 0.0
    %264 = vmatpush1.msra.mxu0 0.0
    %265 = vmatprep.subr.mxu0 0.0
    %266 = vmatpush1.msra.mxu0 0.0
    %267 = vmatprep.subr.mxu0 0.0
    %268 = vmatpush1.msra.mxu0 0.0
    %269 = vmatprep.subr.mxu0 0.0
    %270 = vmatpush1.msra.mxu0 0.0
    %271 = vmatprep.mubr.f32.mxu0 0.0
    %272 = vmatmul.mubr.f32.gmra.mrb[0].mxu0 %v182
    %v273 = vpop.f32.mrb[0].mxu0
    %v274 = vadd.f32 %v205, %v273
    %v275 = vpop.f32.mrb[0].mxu0
    %276 = vmatprep.mubr.f32.mxu0 0.0
    %277 = vmatmul.mubr.f32.gmra.mrb[0].mxu0 %v183
    %v278 = vpop.f32.mrb[0].mxu0
    %v279 = vadd.f32 %v205, %v278
    %v280 = vpop.f32.mrb[0].mxu0
    %281 = vdwg.mxu0
    %v282 = vmax.f32 %v274, 0.0
    %v283 = vmax.f32 %v279, 0.0
    %v284 = vld [vmem:[#allocation8] sm:$0xff]
    %v285 = vld [vmem:[#allocation8 + $0x8] sm:$0xff]
    %v286 = vld [vmem:[#allocation8 + $0x10] sm:$0xff]
    %v287 = vld [vmem:[#allocation8 + $0x18] sm:$0xff]
    %v288 = vld [vmem:[#allocation8 + $0x20] sm:$0xff]
    %v289 = vld [vmem:[#allocation8 + $0x28] sm:$0xff]
    %v290 = vld [vmem:[#allocation8 + $0x30] sm:$0xff]
    %v291 = vld [vmem:[#allocation8 + $0x38] sm:$0xff]
    %v292 = vld [vmem:[#allocation8 + $0x40] sm:$0xff]
    %v293 = vld [vmem:[#allocation8 + $0x48] sm:$0xff]
    %v294 = vld [vmem:[#allocation8 + $0x50] sm:$0xff]
    %v295 = vld [vmem:[#allocation8 + $0x58] sm:$0xff]
    %v296 = vld [vmem:[#allocation8 + $0x60] sm:$0xff]
    %v297 = vld [vmem:[#allocation8 + $0x68] sm:$0xff]
    %v298 = vld [vmem:[#allocation8 + $0x70] sm:$0xff]
    %v299 = vld [vmem:[#allocation8 + $0x78] sm:$0xff]
    %v300 = vld [vmem:[%s6] sm:$0x1]
    %v302 = vlaneseq
    %v303 = vshrl.u32 %v302, 7
    %v304 = vsub.s32 0, %v303
    %v305 = vrot.slane %v300, %v304
    %307 = vmatprep.subr.mxu0 0.0
    %308 = vmatpush1.msra.mxu0 %v284
    %309 = vmatprep.subr.mxu0 0.0
    %310 = vmatpush1.msra.mxu0 %v285
    %311 = vmatprep.subr.mxu0 0.0
    %312 = vmatpush1.msra.mxu0 %v286
    %313 = vmatprep.subr.mxu0 0.0
    %314 = vmatpush1.msra.mxu0 %v287
    %315 = vmatprep.subr.mxu0 0.0
    %316 = vmatpush1.msra.mxu0 %v288
    %317 = vmatprep.subr.mxu0 0.0
    %318 = vmatpush1.msra.mxu0 %v289
    %319 = vmatprep.subr.mxu0 0.0
    %320 = vmatpush1.msra.mxu0 %v290
    %321 = vmatprep.subr.mxu0 0.0
    %322 = vmatpush1.msra.mxu0 %v291
    %323 = vmatprep.subr.mxu0 0.0
    %324 = vmatpush1.msra.mxu0 %v292
    %325 = vmatprep.subr.mxu0 0.0
    %326 = vmatpush1.msra.mxu0 %v293
    %327 = vmatprep.subr.mxu0 0.0
    %328 = vmatpush1.msra.mxu0 %v294
    %329 = vmatprep.subr.mxu0 0.0
    %330 = vmatpush1.msra.mxu0 %v295
    %331 = vmatprep.subr.mxu0 0.0
    %332 = vmatpush1.msra.mxu0 %v296
    %333 = vmatprep.subr.mxu0 0.0
    %334 = vmatpush1.msra.mxu0 %v297
    %335 = vmatprep.subr.mxu0 0.0
    %336 = vmatpush1.msra.mxu0 %v298
    %337 = vmatprep.subr.mxu0 0.0
    %338 = vmatpush1.msra.mxu0 %v299
    %339 = vmatprep.subr.mxu0 0.0
    %340 = vmatpush1.msra.mxu0 0.0
    %341 = vmatprep.subr.mxu0 0.0
    %342 = vmatpush1.msra.mxu0 0.0
    %343 = vmatprep.subr.mxu0 0.0
    %344 = vmatpush1.msra.mxu0 0.0
    %345 = vmatprep.subr.mxu0 0.0
    %346 = vmatpush1.msra.mxu0 0.0
    %347 = vmatprep.subr.mxu0 0.0
    %348 = vmatpush1.msra.mxu0 0.0
    %349 = vmatprep.subr.mxu0 0.0
    %350 = vmatpush1.msra.mxu0 0.0
    %351 = vmatprep.subr.mxu0 0.0
    %352 = vmatpush1.msra.mxu0 0.0
    %353 = vmatprep.subr.mxu0 0.0
    %354 = vmatpush1.msra.mxu0 0.0
    %355 = vmatprep.subr.mxu0 0.0
    %356 = vmatpush1.msra.mxu0 0.0
    %357 = vmatprep.subr.mxu0 0.0
    %358 = vmatpush1.msra.mxu0 0.0
    %359 = vmatprep.subr.mxu0 0.0
    %360 = vmatpush1.msra.mxu0 0.0
    %361 = vmatprep.subr.mxu0 0.0
    %362 = vmatpush1.msra.mxu0 0.0
    %363 = vmatprep.subr.mxu0 0.0
    %364 = vmatpush1.msra.mxu0 0.0
    %365 = vmatprep.subr.mxu0 0.0
    %366 = vmatpush1.msra.mxu0 0.0
    %367 = vmatprep.subr.mxu0 0.0
    %368 = vmatpush1.msra.mxu0 0.0
    %369 = vmatprep.subr.mxu0 0.0
    %370 = vmatpush1.msra.mxu0 0.0
    %371 = vmatprep.mubr.f32.mxu0 0.0
    %372 = vmatmul.mubr.f32.gmra.mrb[0].mxu0 %v282
    %v373 = vpop.f32.mrb[0].mxu0
    %v374 = vadd.f32 %v305, %v373
    %v375 = vpop.f32.mrb[0].mxu0
    %376 = vmatprep.mubr.f32.mxu0 0.0
    %377 = vmatmul.mubr.f32.gmra.mrb[0].mxu0 %v283
    %v378 = vpop.f32.mrb[0].mxu0
    %v379 = vadd.f32 %v305, %v378
    %v380 = vpop.f32.mrb[0].mxu0
    %381 = vdwg.mxu0
    %382 = vst [vmem:[#allocation10] sm:$0xff] %v374
    %383 = vst [vmem:[#allocation10 + $0x8] sm:$0xff] %v379
    // Predicated region
    $region46: #{tpu_custom_call.1} parent=1 // pred_check
      _
    $region47: #{tpu_custom_call.1} parent=1 // pred_check_branch
      %385 = sbr.rel (0) target = $region49
    $region48: #{tpu_custom_call.1} parent=1 // pred_region
      %s387 = ssub.s32 256, 256
      %388 = vsyncadd [#allocation4], %s387
      %s389 = sshll.u32 [#allocation10], 4
      %s390 = int_to_ptr.vmem [resolvable:$true] %s389
      %395 = dma.vmem_to_hbm [thread:$0]  %s390, 256, %s7, [#allocation4], 128, 128, 8
    $region49: #{tpu_custom_call.1} parent=1 // pred_fallthru
      _
    // Predicated region
    $region50: #{tpu_custom_call.1} parent=1 // pred_check
      _
    $region51: #{tpu_custom_call.1} parent=1 // pred_check_branch
      %397 = sbr.rel (0) target = $region53
    $region52: #{tpu_custom_call.1} parent=1 // pred_region
      %398 = dma.done [#allocation4], 256
    $region53: #{tpu_custom_call.1} parent=1 // pred_fallthru
      _
    %399 = vsyncpa [#allocation3], 1
    %400 = vsyncpa [#allocation6], 1
    %401 = vsyncpa [#allocation9], 1
    %402 = vsyncpa [#allocation4], 1

</llo_original>
